<compile_context>
chip_gen: v5e
topology: v5e:2x2
jax: 0.10.0
libtpu: 0.0.40
codegen_flags: <defaults>
</compile_context>

<pallas_src>
import jax
import jax.numpy as jnp
from jax.experimental import pallas as pl
from jax.experimental.pallas import tpu as pltpu


# ----------------------------- kernel ---------------------------------------

def evolve_kernel(hist_ref,
                  wd1_ref, bd1_ref, wd2_ref, bd2_ref,
                  wih_ref, whh_ref, bg_ref,
                  wu1_ref, bu1_ref, wu2_ref, bu2_ref,
                  out_ref):
    hist = hist_ref[...].astype(jnp.float32)          # [S, D_out]
    S = hist.shape[0]
    H = wd2_ref.shape[1]                              # module hidden_dim

    def sigmoid(z):                                   # explicit exp form (EUP)
        return 1.0 / (1.0 + jnp.exp(-z))

    # ---- scale_down: Linear -> ReLU -> Linear --------------------------------
    t0 = jnp.dot(hist, wd1_ref[...], preferred_element_type=jnp.float32) + bd1_ref[...]
    t0 = jnp.maximum(t0, 0.0)
    x = jnp.dot(t0, wd2_ref[...], preferred_element_type=jnp.float32) + bd2_ref[...]   # [S, H]

    # ---- LSTM(H, H, 1 layer), zero initial state -----------------------------
    # Input contributions to all gates for ALL timesteps in one matmul.
    # bg = b_ih + b_hh (folded in the wrapper). Gate order matches PyTorch: i, f, g, o.
    xg = jnp.dot(x, wih_ref[...], preferred_element_type=jnp.float32) + bg_ref[...]    # [S, 4H]
    whh = whh_ref[...]                                                                 # [H, 4H]

    h = jnp.zeros((1, H), jnp.float32)
    c = jnp.zeros((1, H), jnp.float32)
    for t in range(S):                                # static unroll, S known at trace time
        g = xg[t:t + 1, :] + jnp.dot(h, whh, preferred_element_type=jnp.float32)       # [1, 4H]
        i_g = sigmoid(g[:, 0 * H:1 * H])
        f_g = sigmoid(g[:, 1 * H:2 * H])
        g_g = jnp.tanh(g[:, 2 * H:3 * H])
        o_g = sigmoid(g[:, 3 * H:4 * H])
        c = f_g * c + i_g * g_g
        h = o_g * jnp.tanh(c)                         # h after last t == output[-1]

    # ---- scale_up: Linear -> ReLU -> Linear (lane-dense padded output) -------
    u = jnp.dot(h, wu1_ref[...], preferred_element_type=jnp.float32) + bu1_ref[...]
    u = jnp.maximum(u, 0.0)
    y = jnp.dot(u, wu2_ref[...], preferred_element_type=jnp.float32) + bu2_ref[...]    # [1, D_pad]

    out_ref[...] = y.astype(out_ref.dtype)


# ----------------------------- wrapper ---------------------------------------

def evolve_classifier_forward(history, params, nn_hidden, nn_out):
    """history: [S, D_out] (unbatched, as required by nn_construct's flat .view)."""
    S, D = history.shape
    d_pad = params["wu2"].shape[1]

    ordered = [
        history,
        params["wd1"], params["bd1"], params["wd2"], params["bd2"],
        params["wih"], params["whh"], params["bg"],
        params["wu1"], params["bu1"], params["wu2"], params["bu2"],
    ]

    def full_spec(arr):
        n = arr.ndim
        return pl.BlockSpec(arr.shape, lambda i, n=n: (0,) * n)

    out = pl.pallas_call(
        evolve_kernel,
        grid=(1,),                                    # single invocation: no step overhead
        in_specs=[full_spec(a) for a in ordered],
        out_specs=pl.BlockSpec((1, d_pad), lambda i: (0, 0)),
        out_shape=jax.ShapeDtypeStruct((1, d_pad), jnp.float32),
        compiler_params=pltpu.CompilerParams(dimension_semantics=("arbitrary",)),
    )(*ordered)

    output = out[0, :D]                               # drop lane padding -> [D_out]

    # ---- nn_construct: pure slicing / view, done outside the kernel ----------
    h2 = nn_hidden * nn_hidden
    w1 = output[:h2].reshape(nn_hidden, nn_hidden)
    b1 = output[h2:h2 + nn_hidden]
    w2 = output[h2 + nn_hidden:h2 + nn_hidden + nn_out * nn_hidden].reshape(nn_out, nn_hidden)
    b2 = output[h2 + nn_hidden + nn_out * nn_hidden:]
    return output, (w1, b1, w2, b2)


# ----------------------------- params ----------------------------------------

def init_params(key, hidden_dim, out_dim, lane=128):
    """Build PyTorch-shaped params, then pre-transpose / fold for the kernel."""
    H, D = hidden_dim, out_dim
    ks = jax.random.split(key, 12)

    def rnd(k, shape, scale=0.1):
        return jax.random.normal(k, shape, jnp.float32) * scale

    # PyTorch orientation ([out_features, in_features]) -------------------------
    wd1, bd1 = rnd(ks[0], (4 * H, D)), rnd(ks[1], (4 * H,))   # scale_down[0]
    wd2, bd2 = rnd(ks[2], (H, 4 * H)), rnd(ks[3], (H,))       # scale_down[2]
    w_ih, w_hh = rnd(ks[4], (4 * H, H)), rnd(ks[5], (4 * H, H))   # LSTM l0
    b_ih, b_hh = rnd(ks[6], (4 * H,)), rnd(ks[7], (4 * H,))
    wu1, bu1 = rnd(ks[8], (4 * H, H)), rnd(ks[9], (4 * H,))   # scale_up[0]
    wu2, bu2 = rnd(ks[10], (D, 4 * H)), rnd(ks[11], (D,))     # scale_up[2]

    # lane-dense padding of the final projection --------------------------------
    d_pad = ((D + lane - 1) // lane) * lane
    wu2_t = jnp.zeros((4 * H, d_pad), jnp.float32).at[:, :D].set(wu2.T)
    bu2_p = jnp.zeros((1, d_pad), jnp.float32).at[:, :D].set(bu2.reshape(1, D))

    return dict(
        wd1=wd1.T, bd1=bd1.reshape(1, -1),
        wd2=wd2.T, bd2=bd2.reshape(1, -1),
        wih=w_ih.T, whh=w_hh.T,
        bg=(b_ih + b_hh).reshape(1, -1),              # fold the two LSTM biases
        wu1=wu1.T, bu1=bu1.reshape(1, -1),
        wu2=wu2_t, bu2=bu2_p,
    )


# ----------------------------- main -------------------------------------------

if __name__ == "__main__":
    S = 8                       # history length (sequence)
    H = 8                       # EvolveClassifier hidden_dim
    NN_H, NN_O = 8, 4           # nn_construct(hidden_dim, output_dim) args
    D_OUT = NN_H * NN_H + NN_H + NN_O * NN_H + NN_O   # 108 = module output_dim

    key = jax.random.PRNGKey(0)
    k_hist, k_params = jax.random.split(key)
    history = jax.random.normal(k_hist, (S, D_OUT), jnp.float32)
    params = init_params(k_params, H, D_OUT)

    output, (w1, b1, w2, b2) = evolve_classifier_forward(history, params, NN_H, NN_O)
    output = jax.block_until_ready(output)

    assert output.shape == (D_OUT,), output.shape
    assert w1.shape == (NN_H, NN_H) and b1.shape == (NN_H,)
    assert w2.shape == (NN_O, NN_H) and b2.shape == (NN_O,)
    assert bool(jnp.all(jnp.isfinite(output)))
    print("KERNEL_OK")
</pallas_src>

<mosaic_0001>
module attributes {stable_mosaic.version = 11 : i64} {
  func.func @evolve_kernel(%arg0: i32, %arg1: memref<8x108xf32, #tpu.memory_space<vmem>>, %arg2: memref<108x32xf32, #tpu.memory_space<vmem>>, %arg3: memref<1x32xf32, #tpu.memory_space<vmem>>, %arg4: memref<32x8xf32, #tpu.memory_space<vmem>>, %arg5: memref<1x8xf32, #tpu.memory_space<vmem>>, %arg6: memref<8x32xf32, #tpu.memory_space<vmem>>, %arg7: memref<8x32xf32, #tpu.memory_space<vmem>>, %arg8: memref<1x32xf32, #tpu.memory_space<vmem>>, %arg9: memref<8x32xf32, #tpu.memory_space<vmem>>, %arg10: memref<1x32xf32, #tpu.memory_space<vmem>>, %arg11: memref<32x128xf32, #tpu.memory_space<vmem>>, %arg12: memref<1x128xf32, #tpu.memory_space<vmem>>, %arg13: memref<1x128xf32, #tpu.memory_space<vmem>>) attributes {dimension_semantics = [#tpu.dimension_semantics<arbitrary>], iteration_bounds = array<i64: 1>, scalar_prefetch = 0 : i64, scratch_operands = 0 : i64, tpu.core_type = #tpu.core_type<tc>, window_params = [{pipeline_mode = #tpu.pipeline_mode<synchronous>, transform_indices = @transform_0, window_bounds = array<i64: 8, 108>}, {pipeline_mode = #tpu.pipeline_mode<synchronous>, transform_indices = @transform_1, window_bounds = array<i64: 108, 32>}, {pipeline_mode = #tpu.pipeline_mode<synchronous>, transform_indices = @transform_2, window_bounds = array<i64: 1, 32>}, {pipeline_mode = #tpu.pipeline_mode<synchronous>, transform_indices = @transform_3, window_bounds = array<i64: 32, 8>}, {pipeline_mode = #tpu.pipeline_mode<synchronous>, transform_indices = @transform_4, window_bounds = array<i64: 1, 8>}, {pipeline_mode = #tpu.pipeline_mode<synchronous>, transform_indices = @transform_5, window_bounds = array<i64: 8, 32>}, {pipeline_mode = #tpu.pipeline_mode<synchronous>, transform_indices = @transform_6, window_bounds = array<i64: 8, 32>}, {pipeline_mode = #tpu.pipeline_mode<synchronous>, transform_indices = @transform_7, window_bounds = array<i64: 1, 32>}, {pipeline_mode = #tpu.pipeline_mode<synchronous>, transform_indices = @transform_8, window_bounds = array<i64: 8, 32>}, {pipeline_mode = #tpu.pipeline_mode<synchronous>, transform_indices = @transform_9, window_bounds = array<i64: 1, 32>}, {pipeline_mode = #tpu.pipeline_mode<synchronous>, transform_indices = @transform_10, window_bounds = array<i64: 32, 128>}, {pipeline_mode = #tpu.pipeline_mode<synchronous>, transform_indices = @transform_11, window_bounds = array<i64: 1, 128>}, {pipeline_mode = #tpu.pipeline_mode<synchronous>, transform_indices = @transform_12, window_bounds = array<i64: 1, 128>}]} {
    %c0 = arith.constant 0 : index
    %c0_0 = arith.constant 0 : index
    %0 = vector.load %arg1[%c0, %c0_0] : memref<8x108xf32, #tpu.memory_space<vmem>>, vector<8x108xf32>
    %c0_1 = arith.constant 0 : index
    %c0_2 = arith.constant 0 : index
    %1 = vector.load %arg2[%c0_1, %c0_2] : memref<108x32xf32, #tpu.memory_space<vmem>>, vector<108x32xf32>
    %cst = arith.constant dense<0.000000e+00> : vector<8x32xf32>
    %2 = tpu.matmul %0, %1, %cst {dimension_numbers = #tpu.dot_dimension_numbers<[1], [0], [0], [1], [0, 0, 1, 1], [], []>} : vector<8x108xf32>, vector<108x32xf32>, vector<8x32xf32> -> vector<8x32xf32>
    %c0_3 = arith.constant 0 : index
    %c0_4 = arith.constant 0 : index
    %3 = vector.load %arg3[%c0_3, %c0_4] : memref<1x32xf32, #tpu.memory_space<vmem>>, vector<1x32xf32>
    %4 = vector.broadcast %3 : vector<1x32xf32> to vector<8x32xf32>
    %5 = arith.addf %2, %4 : vector<8x32xf32>
    %cst_5 = arith.constant 0.000000e+00 : f32
    %6 = vector.broadcast %cst_5 : f32 to vector<8x32xf32>
    %7 = arith.maximumf %5, %6 : vector<8x32xf32>
    %c0_6 = arith.constant 0 : index
    %c0_7 = arith.constant 0 : index
    %8 = vector.load %arg4[%c0_6, %c0_7] : memref<32x8xf32, #tpu.memory_space<vmem>>, vector<32x8xf32>
    %cst_8 = arith.constant dense<0.000000e+00> : vector<8x8xf32>
    %9 = tpu.matmul %7, %8, %cst_8 {dimension_numbers = #tpu.dot_dimension_numbers<[1], [0], [0], [1], [0, 0, 1, 1], [], []>} : vector<8x32xf32>, vector<32x8xf32>, vector<8x8xf32> -> vector<8x8xf32>
    %c0_9 = arith.constant 0 : index
    %c0_10 = arith.constant 0 : index
    %10 = vector.load %arg5[%c0_9, %c0_10] : memref<1x8xf32, #tpu.memory_space<vmem>>, vector<1x8xf32>
    %11 = vector.broadcast %10 : vector<1x8xf32> to vector<8x8xf32>
    %12 = arith.addf %9, %11 : vector<8x8xf32>
    %c0_11 = arith.constant 0 : index
    %c0_12 = arith.constant 0 : index
    %13 = vector.load %arg6[%c0_11, %c0_12] : memref<8x32xf32, #tpu.memory_space<vmem>>, vector<8x32xf32>
    %cst_13 = arith.constant dense<0.000000e+00> : vector<8x32xf32>
    %14 = tpu.matmul %12, %13, %cst_13 {dimension_numbers = #tpu.dot_dimension_numbers<[1], [0], [0], [1], [0, 0, 1, 1], [], []>} : vector<8x8xf32>, vector<8x32xf32>, vector<8x32xf32> -> vector<8x32xf32>
    %c0_14 = arith.constant 0 : index
    %c0_15 = arith.constant 0 : index
    %15 = vector.load %arg8[%c0_14, %c0_15] : memref<1x32xf32, #tpu.memory_space<vmem>>, vector<1x32xf32>
    %16 = vector.broadcast %15 : vector<1x32xf32> to vector<8x32xf32>
    %17 = arith.addf %14, %16 : vector<8x32xf32>
    %c0_16 = arith.constant 0 : index
    %c0_17 = arith.constant 0 : index
    %18 = vector.load %arg7[%c0_16, %c0_17] : memref<8x32xf32, #tpu.memory_space<vmem>>, vector<8x32xf32>
    %cst_18 = arith.constant 0.000000e+00 : f32
    %19 = vector.broadcast %cst_18 : f32 to vector<1x8xf32>
    %cst_19 = arith.constant 0.000000e+00 : f32
    %20 = vector.broadcast %cst_19 : f32 to vector<1x8xf32>
    %21 = vector.extract_strided_slice %17 {offsets = [0, 0], sizes = [1, 32], strides = [1, 1]} : vector<8x32xf32> to vector<1x32xf32>
    %cst_20 = arith.constant dense<0.000000e+00> : vector<1x32xf32>
    %22 = tpu.matmul %19, %18, %cst_20 {dimension_numbers = #tpu.dot_dimension_numbers<[1], [0], [0], [1], [0, 0, 1, 1], [], []>} : vector<1x8xf32>, vector<8x32xf32>, vector<1x32xf32> -> vector<1x32xf32>
    %23 = arith.addf %21, %22 : vector<1x32xf32>
    %24 = vector.extract_strided_slice %23 {offsets = [0, 0], sizes = [1, 8], strides = [1, 1]} : vector<1x32xf32> to vector<1x8xf32>
    %cst_21 = arith.constant 0.000000e+00 : f32
    %25 = vector.broadcast %cst_21 : f32 to vector<1x8xf32>
    %26 = arith.subf %25, %24 : vector<1x8xf32>
    %27 = math.exp %26 : vector<1x8xf32>
    %cst_22 = arith.constant 1.000000e+00 : f32
    %28 = vector.broadcast %cst_22 : f32 to vector<1x8xf32>
    %29 = arith.addf %28, %27 : vector<1x8xf32>
    %cst_23 = arith.constant 1.000000e+00 : f32
    %30 = vector.broadcast %cst_23 : f32 to vector<1x8xf32>
    %31 = arith.divf %30, %29 : vector<1x8xf32>
    %32 = vector.extract_strided_slice %23 {offsets = [0, 8], sizes = [1, 8], strides = [1, 1]} : vector<1x32xf32> to vector<1x8xf32>
    %cst_24 = arith.constant 0.000000e+00 : f32
    %33 = vector.broadcast %cst_24 : f32 to vector<1x8xf32>
    %34 = arith.subf %33, %32 : vector<1x8xf32>
    %35 = math.exp %34 : vector<1x8xf32>
    %cst_25 = arith.constant 1.000000e+00 : f32
    %36 = vector.broadcast %cst_25 : f32 to vector<1x8xf32>
    %37 = arith.addf %36, %35 : vector<1x8xf32>
    %cst_26 = arith.constant 1.000000e+00 : f32
    %38 = vector.broadcast %cst_26 : f32 to vector<1x8xf32>
    %39 = arith.divf %38, %37 : vector<1x8xf32>
    %40 = vector.extract_strided_slice %23 {offsets = [0, 16], sizes = [1, 8], strides = [1, 1]} : vector<1x32xf32> to vector<1x8xf32>
    %41 = math.tanh %40 : vector<1x8xf32>
    %42 = vector.extract_strided_slice %23 {offsets = [0, 24], sizes = [1, 8], strides = [1, 1]} : vector<1x32xf32> to vector<1x8xf32>
    %cst_27 = arith.constant 0.000000e+00 : f32
    %43 = vector.broadcast %cst_27 : f32 to vector<1x8xf32>
    %44 = arith.subf %43, %42 : vector<1x8xf32>
    %45 = math.exp %44 : vector<1x8xf32>
    %cst_28 = arith.constant 1.000000e+00 : f32
    %46 = vector.broadcast %cst_28 : f32 to vector<1x8xf32>
    %47 = arith.addf %46, %45 : vector<1x8xf32>
    %cst_29 = arith.constant 1.000000e+00 : f32
    %48 = vector.broadcast %cst_29 : f32 to vector<1x8xf32>
    %49 = arith.divf %48, %47 : vector<1x8xf32>
    %50 = arith.mulf %39, %20 : vector<1x8xf32>
    %51 = arith.mulf %31, %41 : vector<1x8xf32>
    %52 = arith.addf %50, %51 : vector<1x8xf32>
    %53 = math.tanh %52 : vector<1x8xf32>
    %54 = arith.mulf %49, %53 : vector<1x8xf32>
    %55 = vector.extract_strided_slice %17 {offsets = [1, 0], sizes = [1, 32], strides = [1, 1]} : vector<8x32xf32> to vector<1x32xf32>
    %cst_30 = arith.constant dense<0.000000e+00> : vector<1x32xf32>
    %56 = tpu.matmul %54, %18, %cst_30 {dimension_numbers = #tpu.dot_dimension_numbers<[1], [0], [0], [1], [0, 0, 1, 1], [], []>} : vector<1x8xf32>, vector<8x32xf32>, vector<1x32xf32> -> vector<1x32xf32>
    %57 = arith.addf %55, %56 : vector<1x32xf32>
    %58 = vector.extract_strided_slice %57 {offsets = [0, 0], sizes = [1, 8], strides = [1, 1]} : vector<1x32xf32> to vector<1x8xf32>
    %cst_31 = arith.constant 0.000000e+00 : f32
    %59 = vector.broadcast %cst_31 : f32 to vector<1x8xf32>
    %60 = arith.subf %59, %58 : vector<1x8xf32>
    %61 = math.exp %60 : vector<1x8xf32>
    %cst_32 = arith.constant 1.000000e+00 : f32
    %62 = vector.broadcast %cst_32 : f32 to vector<1x8xf32>
    %63 = arith.addf %62, %61 : vector<1x8xf32>
    %cst_33 = arith.constant 1.000000e+00 : f32
    %64 = vector.broadcast %cst_33 : f32 to vector<1x8xf32>
    %65 = arith.divf %64, %63 : vector<1x8xf32>
    %66 = vector.extract_strided_slice %57 {offsets = [0, 8], sizes = [1, 8], strides = [1, 1]} : vector<1x32xf32> to vector<1x8xf32>
    %cst_34 = arith.constant 0.000000e+00 : f32
    %67 = vector.broadcast %cst_34 : f32 to vector<1x8xf32>
    %68 = arith.subf %67, %66 : vector<1x8xf32>
    %69 = math.exp %68 : vector<1x8xf32>
    %cst_35 = arith.constant 1.000000e+00 : f32
    %70 = vector.broadcast %cst_35 : f32 to vector<1x8xf32>
    %71 = arith.addf %70, %69 : vector<1x8xf32>
    %cst_36 = arith.constant 1.000000e+00 : f32
    %72 = vector.broadcast %cst_36 : f32 to vector<1x8xf32>
    %73 = arith.divf %72, %71 : vector<1x8xf32>
    %74 = vector.extract_strided_slice %57 {offsets = [0, 16], sizes = [1, 8], strides = [1, 1]} : vector<1x32xf32> to vector<1x8xf32>
    %75 = math.tanh %74 : vector<1x8xf32>
    %76 = vector.extract_strided_slice %57 {offsets = [0, 24], sizes = [1, 8], strides = [1, 1]} : vector<1x32xf32> to vector<1x8xf32>
    %cst_37 = arith.constant 0.000000e+00 : f32
    %77 = vector.broadcast %cst_37 : f32 to vector<1x8xf32>
    %78 = arith.subf %77, %76 : vector<1x8xf32>
    %79 = math.exp %78 : vector<1x8xf32>
    %cst_38 = arith.constant 1.000000e+00 : f32
    %80 = vector.broadcast %cst_38 : f32 to vector<1x8xf32>
    %81 = arith.addf %80, %79 : vector<1x8xf32>
    %cst_39 = arith.constant 1.000000e+00 : f32
    %82 = vector.broadcast %cst_39 : f32 to vector<1x8xf32>
    %83 = arith.divf %82, %81 : vector<1x8xf32>
    %84 = arith.mulf %73, %52 : vector<1x8xf32>
    %85 = arith.mulf %65, %75 : vector<1x8xf32>
    %86 = arith.addf %84, %85 : vector<1x8xf32>
    %87 = math.tanh %86 : vector<1x8xf32>
    %88 = arith.mulf %83, %87 : vector<1x8xf32>
    %89 = vector.extract_strided_slice %17 {offsets = [2, 0], sizes = [1, 32], strides = [1, 1]} : vector<8x32xf32> to vector<1x32xf32>
    %cst_40 = arith.constant dense<0.000000e+00> : vector<1x32xf32>
    %90 = tpu.matmul %88, %18, %cst_40 {dimension_numbers = #tpu.dot_dimension_numbers<[1], [0], [0], [1], [0, 0, 1, 1], [], []>} : vector<1x8xf32>, vector<8x32xf32>, vector<1x32xf32> -> vector<1x32xf32>
    %91 = arith.addf %89, %90 : vector<1x32xf32>
    %92 = vector.extract_strided_slice %91 {offsets = [0, 0], sizes = [1, 8], strides = [1, 1]} : vector<1x32xf32> to vector<1x8xf32>
    %cst_41 = arith.constant 0.000000e+00 : f32
    %93 = vector.broadcast %cst_41 : f32 to vector<1x8xf32>
    %94 = arith.subf %93, %92 : vector<1x8xf32>
    %95 = math.exp %94 : vector<1x8xf32>
    %cst_42 = arith.constant 1.000000e+00 : f32
    %96 = vector.broadcast %cst_42 : f32 to vector<1x8xf32>
    %97 = arith.addf %96, %95 : vector<1x8xf32>
    %cst_43 = arith.constant 1.000000e+00 : f32
    %98 = vector.broadcast %cst_43 : f32 to vector<1x8xf32>
    %99 = arith.divf %98, %97 : vector<1x8xf32>
    %100 = vector.extract_strided_slice %91 {offsets = [0, 8], sizes = [1, 8], strides = [1, 1]} : vector<1x32xf32> to vector<1x8xf32>
    %cst_44 = arith.constant 0.000000e+00 : f32
    %101 = vector.broadcast %cst_44 : f32 to vector<1x8xf32>
    %102 = arith.subf %101, %100 : vector<1x8xf32>
    %103 = math.exp %102 : vector<1x8xf32>
    %cst_45 = arith.constant 1.000000e+00 : f32
    %104 = vector.broadcast %cst_45 : f32 to vector<1x8xf32>
    %105 = arith.addf %104, %103 : vector<1x8xf32>
    %cst_46 = arith.constant 1.000000e+00 : f32
    %106 = vector.broadcast %cst_46 : f32 to vector<1x8xf32>
    %107 = arith.divf %106, %105 : vector<1x8xf32>
    %108 = vector.extract_strided_slice %91 {offsets = [0, 16], sizes = [1, 8], strides = [1, 1]} : vector<1x32xf32> to vector<1x8xf32>
    %109 = math.tanh %108 : vector<1x8xf32>
    %110 = vector.extract_strided_slice %91 {offsets = [0, 24], sizes = [1, 8], strides = [1, 1]} : vector<1x32xf32> to vector<1x8xf32>
    %cst_47 = arith.constant 0.000000e+00 : f32
    %111 = vector.broadcast %cst_47 : f32 to vector<1x8xf32>
    %112 = arith.subf %111, %110 : vector<1x8xf32>
    %113 = math.exp %112 : vector<1x8xf32>
    %cst_48 = arith.constant 1.000000e+00 : f32
    %114 = vector.broadcast %cst_48 : f32 to vector<1x8xf32>
    %115 = arith.addf %114, %113 : vector<1x8xf32>
    %cst_49 = arith.constant 1.000000e+00 : f32
    %116 = vector.broadcast %cst_49 : f32 to vector<1x8xf32>
    %117 = arith.divf %116, %115 : vector<1x8xf32>
    %118 = arith.mulf %107, %86 : vector<1x8xf32>
    %119 = arith.mulf %99, %109 : vector<1x8xf32>
    %120 = arith.addf %118, %119 : vector<1x8xf32>
    %121 = math.tanh %120 : vector<1x8xf32>
    %122 = arith.mulf %117, %121 : vector<1x8xf32>
    %123 = vector.extract_strided_slice %17 {offsets = [3, 0], sizes = [1, 32], strides = [1, 1]} : vector<8x32xf32> to vector<1x32xf32>
    %cst_50 = arith.constant dense<0.000000e+00> : vector<1x32xf32>
    %124 = tpu.matmul %122, %18, %cst_50 {dimension_numbers = #tpu.dot_dimension_numbers<[1], [0], [0], [1], [0, 0, 1, 1], [], []>} : vector<1x8xf32>, vector<8x32xf32>, vector<1x32xf32> -> vector<1x32xf32>
    %125 = arith.addf %123, %124 : vector<1x32xf32>
    %126 = vector.extract_strided_slice %125 {offsets = [0, 0], sizes = [1, 8], strides = [1, 1]} : vector<1x32xf32> to vector<1x8xf32>
    %cst_51 = arith.constant 0.000000e+00 : f32
    %127 = vector.broadcast %cst_51 : f32 to vector<1x8xf32>
    %128 = arith.subf %127, %126 : vector<1x8xf32>
    %129 = math.exp %128 : vector<1x8xf32>
    %cst_52 = arith.constant 1.000000e+00 : f32
    %130 = vector.broadcast %cst_52 : f32 to vector<1x8xf32>
    %131 = arith.addf %130, %129 : vector<1x8xf32>
    %cst_53 = arith.constant 1.000000e+00 : f32
    %132 = vector.broadcast %cst_53 : f32 to vector<1x8xf32>
    %133 = arith.divf %132, %131 : vector<1x8xf32>
    %134 = vector.extract_strided_slice %125 {offsets = [0, 8], sizes = [1, 8], strides = [1, 1]} : vector<1x32xf32> to vector<1x8xf32>
    %cst_54 = arith.constant 0.000000e+00 : f32
    %135 = vector.broadcast %cst_54 : f32 to vector<1x8xf32>
    %136 = arith.subf %135, %134 : vector<1x8xf32>
    %137 = math.exp %136 : vector<1x8xf32>
    %cst_55 = arith.constant 1.000000e+00 : f32
    %138 = vector.broadcast %cst_55 : f32 to vector<1x8xf32>
    %139 = arith.addf %138, %137 : vector<1x8xf32>
    %cst_56 = arith.constant 1.000000e+00 : f32
    %140 = vector.broadcast %cst_56 : f32 to vector<1x8xf32>
    %141 = arith.divf %140, %139 : vector<1x8xf32>
    %142 = vector.extract_strided_slice %125 {offsets = [0, 16], sizes = [1, 8], strides = [1, 1]} : vector<1x32xf32> to vector<1x8xf32>
    %143 = math.tanh %142 : vector<1x8xf32>
    %144 = vector.extract_strided_slice %125 {offsets = [0, 24], sizes = [1, 8], strides = [1, 1]} : vector<1x32xf32> to vector<1x8xf32>
    %cst_57 = arith.constant 0.000000e+00 : f32
    %145 = vector.broadcast %cst_57 : f32 to vector<1x8xf32>
    %146 = arith.subf %145, %144 : vector<1x8xf32>
    %147 = math.exp %146 : vector<1x8xf32>
    %cst_58 = arith.constant 1.000000e+00 : f32
    %148 = vector.broadcast %cst_58 : f32 to vector<1x8xf32>
    %149 = arith.addf %148, %147 : vector<1x8xf32>
    %cst_59 = arith.constant 1.000000e+00 : f32
    %150 = vector.broadcast %cst_59 : f32 to vector<1x8xf32>
    %151 = arith.divf %150, %149 : vector<1x8xf32>
    %152 = arith.mulf %141, %120 : vector<1x8xf32>
    %153 = arith.mulf %133, %143 : vector<1x8xf32>
    %154 = arith.addf %152, %153 : vector<1x8xf32>
    %155 = math.tanh %154 : vector<1x8xf32>
    %156 = arith.mulf %151, %155 : vector<1x8xf32>
    %157 = vector.extract_strided_slice %17 {offsets = [4, 0], sizes = [1, 32], strides = [1, 1]} : vector<8x32xf32> to vector<1x32xf32>
    %cst_60 = arith.constant dense<0.000000e+00> : vector<1x32xf32>
    %158 = tpu.matmul %156, %18, %cst_60 {dimension_numbers = #tpu.dot_dimension_numbers<[1], [0], [0], [1], [0, 0, 1, 1], [], []>} : vector<1x8xf32>, vector<8x32xf32>, vector<1x32xf32> -> vector<1x32xf32>
    %159 = arith.addf %157, %158 : vector<1x32xf32>
    %160 = vector.extract_strided_slice %159 {offsets = [0, 0], sizes = [1, 8], strides = [1, 1]} : vector<1x32xf32> to vector<1x8xf32>
    %cst_61 = arith.constant 0.000000e+00 : f32
    %161 = vector.broadcast %cst_61 : f32 to vector<1x8xf32>
    %162 = arith.subf %161, %160 : vector<1x8xf32>
    %163 = math.exp %162 : vector<1x8xf32>
    %cst_62 = arith.constant 1.000000e+00 : f32
    %164 = vector.broadcast %cst_62 : f32 to vector<1x8xf32>
    %165 = arith.addf %164, %163 : vector<1x8xf32>
    %cst_63 = arith.constant 1.000000e+00 : f32
    %166 = vector.broadcast %cst_63 : f32 to vector<1x8xf32>
    %167 = arith.divf %166, %165 : vector<1x8xf32>
    %168 = vector.extract_strided_slice %159 {offsets = [0, 8], sizes = [1, 8], strides = [1, 1]} : vector<1x32xf32> to vector<1x8xf32>
    %cst_64 = arith.constant 0.000000e+00 : f32
    %169 = vector.broadcast %cst_64 : f32 to vector<1x8xf32>
    %170 = arith.subf %169, %168 : vector<1x8xf32>
    %171 = math.exp %170 : vector<1x8xf32>
    %cst_65 = arith.constant 1.000000e+00 : f32
    %172 = vector.broadcast %cst_65 : f32 to vector<1x8xf32>
    %173 = arith.addf %172, %171 : vector<1x8xf32>
    %cst_66 = arith.constant 1.000000e+00 : f32
    %174 = vector.broadcast %cst_66 : f32 to vector<1x8xf32>
    %175 = arith.divf %174, %173 : vector<1x8xf32>
    %176 = vector.extract_strided_slice %159 {offsets = [0, 16], sizes = [1, 8], strides = [1, 1]} : vector<1x32xf32> to vector<1x8xf32>
    %177 = math.tanh %176 : vector<1x8xf32>
    %178 = vector.extract_strided_slice %159 {offsets = [0, 24], sizes = [1, 8], strides = [1, 1]} : vector<1x32xf32> to vector<1x8xf32>
    %cst_67 = arith.constant 0.000000e+00 : f32
    %179 = vector.broadcast %cst_67 : f32 to vector<1x8xf32>
    %180 = arith.subf %179, %178 : vector<1x8xf32>
    %181 = math.exp %180 : vector<1x8xf32>
    %cst_68 = arith.constant 1.000000e+00 : f32
    %182 = vector.broadcast %cst_68 : f32 to vector<1x8xf32>
    %183 = arith.addf %182, %181 : vector<1x8xf32>
    %cst_69 = arith.constant 1.000000e+00 : f32
    %184 = vector.broadcast %cst_69 : f32 to vector<1x8xf32>
    %185 = arith.divf %184, %183 : vector<1x8xf32>
    %186 = arith.mulf %175, %154 : vector<1x8xf32>
    %187 = arith.mulf %167, %177 : vector<1x8xf32>
    %188 = arith.addf %186, %187 : vector<1x8xf32>
    %189 = math.tanh %188 : vector<1x8xf32>
    %190 = arith.mulf %185, %189 : vector<1x8xf32>
    %191 = vector.extract_strided_slice %17 {offsets = [5, 0], sizes = [1, 32], strides = [1, 1]} : vector<8x32xf32> to vector<1x32xf32>
    %cst_70 = arith.constant dense<0.000000e+00> : vector<1x32xf32>
    %192 = tpu.matmul %190, %18, %cst_70 {dimension_numbers = #tpu.dot_dimension_numbers<[1], [0], [0], [1], [0, 0, 1, 1], [], []>} : vector<1x8xf32>, vector<8x32xf32>, vector<1x32xf32> -> vector<1x32xf32>
    %193 = arith.addf %191, %192 : vector<1x32xf32>
    %194 = vector.extract_strided_slice %193 {offsets = [0, 0], sizes = [1, 8], strides = [1, 1]} : vector<1x32xf32> to vector<1x8xf32>
    %cst_71 = arith.constant 0.000000e+00 : f32
    %195 = vector.broadcast %cst_71 : f32 to vector<1x8xf32>
    %196 = arith.subf %195, %194 : vector<1x8xf32>
    %197 = math.exp %196 : vector<1x8xf32>
    %cst_72 = arith.constant 1.000000e+00 : f32
    %198 = vector.broadcast %cst_72 : f32 to vector<1x8xf32>
    %199 = arith.addf %198, %197 : vector<1x8xf32>
    %cst_73 = arith.constant 1.000000e+00 : f32
    %200 = vector.broadcast %cst_73 : f32 to vector<1x8xf32>
    %201 = arith.divf %200, %199 : vector<1x8xf32>
    %202 = vector.extract_strided_slice %193 {offsets = [0, 8], sizes = [1, 8], strides = [1, 1]} : vector<1x32xf32> to vector<1x8xf32>
    %cst_74 = arith.constant 0.000000e+00 : f32
    %203 = vector.broadcast %cst_74 : f32 to vector<1x8xf32>
    %204 = arith.subf %203, %202 : vector<1x8xf32>
    %205 = math.exp %204 : vector<1x8xf32>
    %cst_75 = arith.constant 1.000000e+00 : f32
    %206 = vector.broadcast %cst_75 : f32 to vector<1x8xf32>
    %207 = arith.addf %206, %205 : vector<1x8xf32>
    %cst_76 = arith.constant 1.000000e+00 : f32
    %208 = vector.broadcast %cst_76 : f32 to vector<1x8xf32>
    %209 = arith.divf %208, %207 : vector<1x8xf32>
    %210 = vector.extract_strided_slice %193 {offsets = [0, 16], sizes = [1, 8], strides = [1, 1]} : vector<1x32xf32> to vector<1x8xf32>
    %211 = math.tanh %210 : vector<1x8xf32>
    %212 = vector.extract_strided_slice %193 {offsets = [0, 24], sizes = [1, 8], strides = [1, 1]} : vector<1x32xf32> to vector<1x8xf32>
    %cst_77 = arith.constant 0.000000e+00 : f32
    %213 = vector.broadcast %cst_77 : f32 to vector<1x8xf32>
    %214 = arith.subf %213, %212 : vector<1x8xf32>
    %215 = math.exp %214 : vector<1x8xf32>
    %cst_78 = arith.constant 1.000000e+00 : f32
    %216 = vector.broadcast %cst_78 : f32 to vector<1x8xf32>
    %217 = arith.addf %216, %215 : vector<1x8xf32>
    %cst_79 = arith.constant 1.000000e+00 : f32
    %218 = vector.broadcast %cst_79 : f32 to vector<1x8xf32>
    %219 = arith.divf %218, %217 : vector<1x8xf32>
    %220 = arith.mulf %209, %188 : vector<1x8xf32>
    %221 = arith.mulf %201, %211 : vector<1x8xf32>
    %222 = arith.addf %220, %221 : vector<1x8xf32>
    %223 = math.tanh %222 : vector<1x8xf32>
    %224 = arith.mulf %219, %223 : vector<1x8xf32>
    %225 = vector.extract_strided_slice %17 {offsets = [6, 0], sizes = [1, 32], strides = [1, 1]} : vector<8x32xf32> to vector<1x32xf32>
    %cst_80 = arith.constant dense<0.000000e+00> : vector<1x32xf32>
    %226 = tpu.matmul %224, %18, %cst_80 {dimension_numbers = #tpu.dot_dimension_numbers<[1], [0], [0], [1], [0, 0, 1, 1], [], []>} : vector<1x8xf32>, vector<8x32xf32>, vector<1x32xf32> -> vector<1x32xf32>
    %227 = arith.addf %225, %226 : vector<1x32xf32>
    %228 = vector.extract_strided_slice %227 {offsets = [0, 0], sizes = [1, 8], strides = [1, 1]} : vector<1x32xf32> to vector<1x8xf32>
    %cst_81 = arith.constant 0.000000e+00 : f32
    %229 = vector.broadcast %cst_81 : f32 to vector<1x8xf32>
    %230 = arith.subf %229, %228 : vector<1x8xf32>
    %231 = math.exp %230 : vector<1x8xf32>
    %cst_82 = arith.constant 1.000000e+00 : f32
    %232 = vector.broadcast %cst_82 : f32 to vector<1x8xf32>
    %233 = arith.addf %232, %231 : vector<1x8xf32>
    %cst_83 = arith.constant 1.000000e+00 : f32
    %234 = vector.broadcast %cst_83 : f32 to vector<1x8xf32>
    %235 = arith.divf %234, %233 : vector<1x8xf32>
    %236 = vector.extract_strided_slice %227 {offsets = [0, 8], sizes = [1, 8], strides = [1, 1]} : vector<1x32xf32> to vector<1x8xf32>
    %cst_84 = arith.constant 0.000000e+00 : f32
    %237 = vector.broadcast %cst_84 : f32 to vector<1x8xf32>
    %238 = arith.subf %237, %236 : vector<1x8xf32>
    %239 = math.exp %238 : vector<1x8xf32>
    %cst_85 = arith.constant 1.000000e+00 : f32
    %240 = vector.broadcast %cst_85 : f32 to vector<1x8xf32>
    %241 = arith.addf %240, %239 : vector<1x8xf32>
    %cst_86 = arith.constant 1.000000e+00 : f32
    %242 = vector.broadcast %cst_86 : f32 to vector<1x8xf32>
    %243 = arith.divf %242, %241 : vector<1x8xf32>
    %244 = vector.extract_strided_slice %227 {offsets = [0, 16], sizes = [1, 8], strides = [1, 1]} : vector<1x32xf32> to vector<1x8xf32>
    %245 = math.tanh %244 : vector<1x8xf32>
    %246 = vector.extract_strided_slice %227 {offsets = [0, 24], sizes = [1, 8], strides = [1, 1]} : vector<1x32xf32> to vector<1x8xf32>
    %cst_87 = arith.constant 0.000000e+00 : f32
    %247 = vector.broadcast %cst_87 : f32 to vector<1x8xf32>
    %248 = arith.subf %247, %246 : vector<1x8xf32>
    %249 = math.exp %248 : vector<1x8xf32>
    %cst_88 = arith.constant 1.000000e+00 : f32
    %250 = vector.broadcast %cst_88 : f32 to vector<1x8xf32>
    %251 = arith.addf %250, %249 : vector<1x8xf32>
    %cst_89 = arith.constant 1.000000e+00 : f32
    %252 = vector.broadcast %cst_89 : f32 to vector<1x8xf32>
    %253 = arith.divf %252, %251 : vector<1x8xf32>
    %254 = arith.mulf %243, %222 : vector<1x8xf32>
    %255 = arith.mulf %235, %245 : vector<1x8xf32>
    %256 = arith.addf %254, %255 : vector<1x8xf32>
    %257 = math.tanh %256 : vector<1x8xf32>
    %258 = arith.mulf %253, %257 : vector<1x8xf32>
    %259 = vector.extract_strided_slice %17 {offsets = [7, 0], sizes = [1, 32], strides = [1, 1]} : vector<8x32xf32> to vector<1x32xf32>
    %cst_90 = arith.constant dense<0.000000e+00> : vector<1x32xf32>
    %260 = tpu.matmul %258, %18, %cst_90 {dimension_numbers = #tpu.dot_dimension_numbers<[1], [0], [0], [1], [0, 0, 1, 1], [], []>} : vector<1x8xf32>, vector<8x32xf32>, vector<1x32xf32> -> vector<1x32xf32>
    %261 = arith.addf %259, %260 : vector<1x32xf32>
    %262 = vector.extract_strided_slice %261 {offsets = [0, 0], sizes = [1, 8], strides = [1, 1]} : vector<1x32xf32> to vector<1x8xf32>
    %cst_91 = arith.constant 0.000000e+00 : f32
    %263 = vector.broadcast %cst_91 : f32 to vector<1x8xf32>
    %264 = arith.subf %263, %262 : vector<1x8xf32>
    %265 = math.exp %264 : vector<1x8xf32>
    %cst_92 = arith.constant 1.000000e+00 : f32
    %266 = vector.broadcast %cst_92 : f32 to vector<1x8xf32>
    %267 = arith.addf %266, %265 : vector<1x8xf32>
    %cst_93 = arith.constant 1.000000e+00 : f32
    %268 = vector.broadcast %cst_93 : f32 to vector<1x8xf32>
    %269 = arith.divf %268, %267 : vector<1x8xf32>
    %270 = vector.extract_strided_slice %261 {offsets = [0, 8], sizes = [1, 8], strides = [1, 1]} : vector<1x32xf32> to vector<1x8xf32>
    %cst_94 = arith.constant 0.000000e+00 : f32
    %271 = vector.broadcast %cst_94 : f32 to vector<1x8xf32>
    %272 = arith.subf %271, %270 : vector<1x8xf32>
    %273 = math.exp %272 : vector<1x8xf32>
    %cst_95 = arith.constant 1.000000e+00 : f32
    %274 = vector.broadcast %cst_95 : f32 to vector<1x8xf32>
    %275 = arith.addf %274, %273 : vector<1x8xf32>
    %cst_96 = arith.constant 1.000000e+00 : f32
    %276 = vector.broadcast %cst_96 : f32 to vector<1x8xf32>
    %277 = arith.divf %276, %275 : vector<1x8xf32>
    %278 = vector.extract_strided_slice %261 {offsets = [0, 16], sizes = [1, 8], strides = [1, 1]} : vector<1x32xf32> to vector<1x8xf32>
    %279 = math.tanh %278 : vector<1x8xf32>
    %280 = vector.extract_strided_slice %261 {offsets = [0, 24], sizes = [1, 8], strides = [1, 1]} : vector<1x32xf32> to vector<1x8xf32>
    %cst_97 = arith.constant 0.000000e+00 : f32
    %281 = vector.broadcast %cst_97 : f32 to vector<1x8xf32>
    %282 = arith.subf %281, %280 : vector<1x8xf32>
    %283 = math.exp %282 : vector<1x8xf32>
    %cst_98 = arith.constant 1.000000e+00 : f32
    %284 = vector.broadcast %cst_98 : f32 to vector<1x8xf32>
    %285 = arith.addf %284, %283 : vector<1x8xf32>
    %cst_99 = arith.constant 1.000000e+00 : f32
    %286 = vector.broadcast %cst_99 : f32 to vector<1x8xf32>
    %287 = arith.divf %286, %285 : vector<1x8xf32>
    %288 = arith.mulf %277, %256 : vector<1x8xf32>
    %289 = arith.mulf %269, %279 : vector<1x8xf32>
    %290 = arith.addf %288, %289 : vector<1x8xf32>
    %291 = math.tanh %290 : vector<1x8xf32>
    %292 = arith.mulf %287, %291 : vector<1x8xf32>
    %c0_100 = arith.constant 0 : index
    %c0_101 = arith.constant 0 : index
    %293 = vector.load %arg9[%c0_100, %c0_101] : memref<8x32xf32, #tpu.memory_space<vmem>>, vector<8x32xf32>
    %cst_102 = arith.constant dense<0.000000e+00> : vector<1x32xf32>
    %294 = tpu.matmul %292, %293, %cst_102 {dimension_numbers = #tpu.dot_dimension_numbers<[1], [0], [0], [1], [0, 0, 1, 1], [], []>} : vector<1x8xf32>, vector<8x32xf32>, vector<1x32xf32> -> vector<1x32xf32>
    %c0_103 = arith.constant 0 : index
    %c0_104 = arith.constant 0 : index
    %295 = vector.load %arg10[%c0_103, %c0_104] : memref<1x32xf32, #tpu.memory_space<vmem>>, vector<1x32xf32>
    %296 = arith.addf %294, %295 : vector<1x32xf32>
    %cst_105 = arith.constant 0.000000e+00 : f32
    %297 = vector.broadcast %cst_105 : f32 to vector<1x32xf32>
    %298 = arith.maximumf %296, %297 : vector<1x32xf32>
    %c0_106 = arith.constant 0 : index
    %c0_107 = arith.constant 0 : index
    %299 = vector.load %arg11[%c0_106, %c0_107] : memref<32x128xf32, #tpu.memory_space<vmem>>, vector<32x128xf32>
    %cst_108 = arith.constant dense<0.000000e+00> : vector<1x128xf32>
    %300 = tpu.matmul %298, %299, %cst_108 {dimension_numbers = #tpu.dot_dimension_numbers<[1], [0], [0], [1], [0, 0, 1, 1], [], []>} : vector<1x32xf32>, vector<32x128xf32>, vector<1x128xf32> -> vector<1x128xf32>
    %c0_109 = arith.constant 0 : index
    %c0_110 = arith.constant 0 : index
    %301 = vector.load %arg12[%c0_109, %c0_110] : memref<1x128xf32, #tpu.memory_space<vmem>>, vector<1x128xf32>
    %302 = arith.addf %300, %301 : vector<1x128xf32>
    %c0_111 = arith.constant 0 : index
    %c0_112 = arith.constant 0 : index
    %303 = vector.load %arg13[%c0_111, %c0_112] : memref<1x128xf32, #tpu.memory_space<vmem>>, vector<1x128xf32>
    tpu.vector_store %arg13[%c0_111, %c0_112], %302 {strides = array<i32>} : memref<1x128xf32, #tpu.memory_space<vmem>>, vector<1x128xf32>,
    return
  }
  func.func @transform_0(%arg0: i32) -> (i32, i32) {
    %c0_i32 = arith.constant 0 : i32
    %c0_i32_0 = arith.constant 0 : i32
    %c0_i32_1 = arith.constant 0 : i32
    return %c0_i32, %c0_i32_0 : i32, i32
  }
  func.func @transform_1(%arg0: i32) -> (i32, i32) {
    %c0_i32 = arith.constant 0 : i32
    %c0_i32_0 = arith.constant 0 : i32
    %c0_i32_1 = arith.constant 0 : i32
    return %c0_i32, %c0_i32_0 : i32, i32
  }
  func.func @transform_2(%arg0: i32) -> (i32, i32) {
    %c0_i32 = arith.constant 0 : i32
    %c0_i32_0 = arith.constant 0 : i32
    %c0_i32_1 = arith.constant 0 : i32
    return %c0_i32, %c0_i32_0 : i32, i32
  }
  func.func @transform_3(%arg0: i32) -> (i32, i32) {
    %c0_i32 = arith.constant 0 : i32
    %c0_i32_0 = arith.constant 0 : i32
    %c0_i32_1 = arith.constant 0 : i32
    return %c0_i32, %c0_i32_0 : i32, i32
  }
  func.func @transform_4(%arg0: i32) -> (i32, i32) {
    %c0_i32 = arith.constant 0 : i32
    %c0_i32_0 = arith.constant 0 : i32
    %c0_i32_1 = arith.constant 0 : i32
    return %c0_i32, %c0_i32_0 : i32, i32
  }
  func.func @transform_5(%arg0: i32) -> (i32, i32) {
    %c0_i32 = arith.constant 0 : i32
    %c0_i32_0 = arith.constant 0 : i32
    %c0_i32_1 = arith.constant 0 : i32
    return %c0_i32, %c0_i32_0 : i32, i32
  }
  func.func @transform_6(%arg0: i32) -> (i32, i32) {
    %c0_i32 = arith.constant 0 : i32
    %c0_i32_0 = arith.constant 0 : i32
    %c0_i32_1 = arith.constant 0 : i32
    return %c0_i32, %c0_i32_0 : i32, i32
  }
  func.func @transform_7(%arg0: i32) -> (i32, i32) {
    %c0_i32 = arith.constant 0 : i32
    %c0_i32_0 = arith.constant 0 : i32
    %c0_i32_1 = arith.constant 0 : i32
    return %c0_i32, %c0_i32_0 : i32, i32
  }
  func.func @transform_8(%arg0: i32) -> (i32, i32) {
    %c0_i32 = arith.constant 0 : i32
    %c0_i32_0 = arith.constant 0 : i32
    %c0_i32_1 = arith.constant 0 : i32
    return %c0_i32, %c0_i32_0 : i32, i32
  }
  func.func @transform_9(%arg0: i32) -> (i32, i32) {
    %c0_i32 = arith.constant 0 : i32
    %c0_i32_0 = arith.constant 0 : i32
    %c0_i32_1 = arith.constant 0 : i32
    return %c0_i32, %c0_i32_0 : i32, i32
  }
  func.func @transform_10(%arg0: i32) -> (i32, i32) {
    %c0_i32 = arith.constant 0 : i32
    %c0_i32_0 = arith.constant 0 : i32
    %c0_i32_1 = arith.constant 0 : i32
    return %c0_i32, %c0_i32_0 : i32, i32
  }
  func.func @transform_11(%arg0: i32) -> (i32, i32) {
    %c0_i32 = arith.constant 0 : i32
    %c0_i32_0 = arith.constant 0 : i32
    %c0_i32_1 = arith.constant 0 : i32
    return %c0_i32, %c0_i32_0 : i32, i32
  }
  func.func @transform_12(%arg0: i32) -> (i32, i32) {
    %c0_i32 = arith.constant 0 : i32
    %c0_i32_0 = arith.constant 0 : i32
    %c0_i32_1 = arith.constant 0 : i32
    return %c0_i32, %c0_i32_0 : i32, i32
  }
}

</mosaic_0001>

<llo_original>
// kernel: tpu_custom_call.1
$region0: #{tpu_custom_call.1}
  #allocation0 [shape = 'u32[]', space=smem, size = 0x4, offset = 0x4, fixed_abs, tag = 'smem constant byte address 0x4 - core index']
  #allocation1 [shape = 'u32[72,128]{1,0:T(1,128)}', space=vmem, size = 0x9000, scoped, tag = 'internal scratch']
  %s0 = inlined_call_operand.vmem [shape: f32[8,108], index: 0, kind: input, shape index: {}]
  %s1 = inlined_call_operand.vmem [shape: f32[108,32], index: 1, kind: input, shape index: {}]
  %s2 = inlined_call_operand.vmem [shape: f32[1,32], index: 2, kind: input, shape index: {}]
  %s3 = inlined_call_operand.vmem [shape: f32[32,8], index: 3, kind: input, shape index: {}]
  %s4 = inlined_call_operand.vmem [shape: f32[1,8], index: 4, kind: input, shape index: {}]
  %s5 = inlined_call_operand.vmem [shape: f32[8,32], index: 5, kind: input, shape index: {}]
  %s6 = inlined_call_operand.vmem [shape: f32[8,32], index: 6, kind: input, shape index: {}]
  %s7 = inlined_call_operand.vmem [shape: f32[1,32], index: 7, kind: input, shape index: {}]
  %s8 = inlined_call_operand.vmem [shape: f32[8,32], index: 8, kind: input, shape index: {}]
  %s9 = inlined_call_operand.vmem [shape: f32[1,32], index: 9, kind: input, shape index: {}]
  %s10 = inlined_call_operand.vmem [shape: f32[32,128], index: 10, kind: input, shape index: {}]
  %s11 = inlined_call_operand.vmem [shape: f32[1,128], index: 11, kind: input, shape index: {}]
  %s12 = inlined_call_operand.hbm [shape: f32[1,128], index: 12, kind: output, shape index: {}]
  %s13 = sld [smem:[#allocation0]]
  $region58: #{tpu_custom_call.1} parent=0
    _
  %s15 = ssub.s32 1, %s13
  %s16 = scalar_select 0, %s15, %s13
  $region1: #{tpu_custom_call.1} parent=0
    #allocation2 [shape = 'u8[512]{0}', space=vmem, size = 0x400, scoped, tag = 'output window, operand 0, single buffered']
    #allocation3 [shape = 's32[1]{0}', space=sflag, size = 0x4, scoped, tag = 'scoped memory for tpu_custom_call.1']
    %17 = vsyncpa [#allocation3], 0
    // Predicated region
    $region2: #{tpu_custom_call.1} parent=1 // pred_check
      _
    $region3: #{tpu_custom_call.1} parent=1 // pred_check_branch
      %19 = sbr.rel (0) target = $region5
    $region4: #{tpu_custom_call.1} parent=1 // pred_region
      _
    $region5: #{tpu_custom_call.1} parent=1 // pred_fallthru
      _
    // Predicated region
    $region6: #{tpu_custom_call.1} parent=1 // pred_check
      _
    $region7: #{tpu_custom_call.1} parent=1 // pred_check_branch
      %21 = sbr.rel (0) target = $region9
    $region8: #{tpu_custom_call.1} parent=1 // pred_region
      _
    $region9: #{tpu_custom_call.1} parent=1 // pred_fallthru
      _
    // Predicated region
    $region10: #{tpu_custom_call.1} parent=1 // pred_check
      _
    $region11: #{tpu_custom_call.1} parent=1 // pred_check_branch
      %23 = sbr.rel (0) target = $region13
    $region12: #{tpu_custom_call.1} parent=1 // pred_region
      _
    $region13: #{tpu_custom_call.1} parent=1 // pred_fallthru
      _
    // Predicated region
    $region14: #{tpu_custom_call.1} parent=1 // pred_check
      _
    $region15: #{tpu_custom_call.1} parent=1 // pred_check_branch
      %25 = sbr.rel (0) target = $region17
    $region16: #{tpu_custom_call.1} parent=1 // pred_region
      _
    $region17: #{tpu_custom_call.1} parent=1 // pred_fallthru
      _
    // Predicated region
    $region18: #{tpu_custom_call.1} parent=1 // pred_check
      _
    $region19: #{tpu_custom_call.1} parent=1 // pred_check_branch
      %27 = sbr.rel (0) target = $region21
    $region20: #{tpu_custom_call.1} parent=1 // pred_region
      _
    $region21: #{tpu_custom_call.1} parent=1 // pred_fallthru
      _
    // Predicated region
    $region22: #{tpu_custom_call.1} parent=1 // pred_check
      _
    $region23: #{tpu_custom_call.1} parent=1 // pred_check_branch
      %29 = sbr.rel (0) target = $region25
    $region24: #{tpu_custom_call.1} parent=1 // pred_region
      _
    $region25: #{tpu_custom_call.1} parent=1 // pred_fallthru
      _
    // Predicated region
    $region26: #{tpu_custom_call.1} parent=1 // pred_check
      _
    $region27: #{tpu_custom_call.1} parent=1 // pred_check_branch
      %31 = sbr.rel (0) target = $region29
    $region28: #{tpu_custom_call.1} parent=1 // pred_region
      _
    $region29: #{tpu_custom_call.1} parent=1 // pred_fallthru
      _
    // Predicated region
    $region30: #{tpu_custom_call.1} parent=1 // pred_check
      _
    $region31: #{tpu_custom_call.1} parent=1 // pred_check_branch
      %33 = sbr.rel (0) target = $region33
    $region32: #{tpu_custom_call.1} parent=1 // pred_region
      _
    $region33: #{tpu_custom_call.1} parent=1 // pred_fallthru
      _
    // Predicated region
    $region34: #{tpu_custom_call.1} parent=1 // pred_check
      _
    $region35: #{tpu_custom_call.1} parent=1 // pred_check_branch
      %35 = sbr.rel (0) target = $region37
    $region36: #{tpu_custom_call.1} parent=1 // pred_region
      _
    $region37: #{tpu_custom_call.1} parent=1 // pred_fallthru
      _
    // Predicated region
    $region38: #{tpu_custom_call.1} parent=1 // pred_check
      _
    $region39: #{tpu_custom_call.1} parent=1 // pred_check_branch
      %37 = sbr.rel (0) target = $region41
    $region40: #{tpu_custom_call.1} parent=1 // pred_region
      _
    $region41: #{tpu_custom_call.1} parent=1 // pred_fallthru
      _
    // Predicated region
    $region42: #{tpu_custom_call.1} parent=1 // pred_check
      _
    $region43: #{tpu_custom_call.1} parent=1 // pred_check_branch
      %39 = sbr.rel (0) target = $region45
    $region44: #{tpu_custom_call.1} parent=1 // pred_region
      _
    $region45: #{tpu_custom_call.1} parent=1 // pred_fallthru
      _
    // Predicated region
    $region46: #{tpu_custom_call.1} parent=1 // pred_check
      _
    $region47: #{tpu_custom_call.1} parent=1 // pred_check_branch
      %41 = sbr.rel (0) target = $region49
    $region48: #{tpu_custom_call.1} parent=1 // pred_region
      _
    $region49: #{tpu_custom_call.1} parent=1 // pred_fallthru
      _
    %v42 = vld [vmem:[%s0] sm:$0xff]
    %v43 = vld [vmem:[%s1] sm:$0xff]
    %v44 = vld [vmem:[%s1 + $0x8] sm:$0xff]
    %v45 = vld [vmem:[%s1 + $0x10] sm:$0xff]
    %v46 = vld [vmem:[%s1 + $0x18] sm:$0xff]
    %v47 = vld [vmem:[%s1 + $0x20] sm:$0xff]
    %v48 = vld [vmem:[%s1 + $0x28] sm:$0xff]
    %v49 = vld [vmem:[%s1 + $0x30] sm:$0xff]
    %v50 = vld [vmem:[%s1 + $0x38] sm:$0xff]
    %v51 = vld [vmem:[%s1 + $0x40] sm:$0xff]
    %v52 = vld [vmem:[%s1 + $0x48] sm:$0xff]
    %v53 = vld [vmem:[%s1 + $0x50] sm:$0xff]
    %v54 = vld [vmem:[%s1 + $0x58] sm:$0xff]
    %v55 = vld [vmem:[%s1 + $0x60] sm:$0xff]
    %v56 = vld [vmem:[%s1 + $0x68] sm:$0xf]
    %v57 = vld [vmem:[%s2] sm:$0x1]
    %v59 = vperm.slane %v57, 0
    %vm61 = vcmask 883712
    %v63 = vsel %vm61, %v42, 0
    %vm65 = vcmask 1043456
    %v67 = vsel %vm65, %v56, 0
    %69 = vmatpush.msra.mxu0 0.0
    %70 = vmatpush.msra.mxu0 0.0
    %71 = vmatpush.msra.mxu0 %v67
    %72 = vmatpush.msra.mxu0 %v55
    %73 = vmatpush.msra.mxu0 %v54
    %74 = vmatpush.msra.mxu0 %v53
    %75 = vmatpush.msra.mxu0 %v52
    %76 = vmatpush.msra.mxu0 %v51
    %77 = vmatpush.msra.mxu0 %v50
    %78 = vmatpush.msra.mxu0 %v49
    %79 = vmatpush.msra.mxu0 %v48
    %80 = vmatpush.msra.mxu0 %v47
    %81 = vmatpush.msra.mxu0 %v46
    %82 = vmatpush.msra.mxu0 %v45
    %83 = vmatpush.msra.mxu0 %v44
    %84 = vmatpush.msra.mxu0 %v43
    %85 = vmatmul.f32.gmra.mxu0 %v63
    %v86 = vpop.f32.mrf.mxu0
    %v87 = vadd.f32 %v59, %v86
    %88 = vdwg.mxu0
    %v89 = vmax.f32 %v87, 0.0
    %v90 = vld [vmem:[%s3] sm:$0xff]
    %v91 = vld [vmem:[%s3 + $0x8] sm:$0xff]
    %v92 = vld [vmem:[%s3 + $0x10] sm:$0xff]
    %v93 = vld [vmem:[%s3 + $0x18] sm:$0xff]
    %v94 = vld [vmem:[%s4] sm:$0x1]
    %v96 = vperm.slane %v94, 0
    %vm98 = vcmask 261120
    %v100 = vsel %vm98, %v89, 0
    %102 = vmatpush.msra.mxu0 0.0
    %103 = vmatpush.msra.mxu0 0.0
    %104 = vmatpush.msra.mxu0 0.0
    %105 = vmatpush.msra.mxu0 0.0
    %106 = vmatpush.msra.mxu0 0.0
    %107 = vmatpush.msra.mxu0 0.0
    %108 = vmatpush.msra.mxu0 0.0
    %109 = vmatpush.msra.mxu0 0.0
    %110 = vmatpush.msra.mxu0 0.0
    %111 = vmatpush.msra.mxu0 0.0
    %112 = vmatpush.msra.mxu0 0.0
    %113 = vmatpush.msra.mxu0 0.0
    %114 = vmatpush.msra.mxu0 %v93
    %115 = vmatpush.msra.mxu0 %v92
    %116 = vmatpush.msra.mxu0 %v91
    %117 = vmatpush.msra.mxu0 %v90
    %118 = vmatmul.f32.gmra.mxu0 %v100
    %v119 = vpop.f32.mrf.mxu0
    %v120 = vadd.f32 %v96, %v119
    %121 = vdwg.mxu0
    %v122 = vld [vmem:[%s5] sm:$0xff]
    %v123 = vld [vmem:[%s7] sm:$0x1]
    %v125 = vperm.slane %v123, 0
    %vm127 = vcmask 64512
    %v129 = vsel %vm127, %v120, 0
    %131 = vmatpush.msra.mxu0 0.0
    %132 = vmatpush.msra.mxu0 0.0
    %133 = vmatpush.msra.mxu0 0.0
    %134 = vmatpush.msra.mxu0 0.0
    %135 = vmatpush.msra.mxu0 0.0
    %136 = vmatpush.msra.mxu0 0.0
    %137 = vmatpush.msra.mxu0 0.0
    %138 = vmatpush.msra.mxu0 0.0
    %139 = vmatpush.msra.mxu0 0.0
    %140 = vmatpush.msra.mxu0 0.0
    %141 = vmatpush.msra.mxu0 0.0
    %142 = vmatpush.msra.mxu0 0.0
    %143 = vmatpush.msra.mxu0 0.0
    %144 = vmatpush.msra.mxu0 0.0
    %145 = vmatpush.msra.mxu0 0.0
    %146 = vmatpush.msra.mxu0 %v122
    %147 = vmatmul.f32.gmra.mxu0 %v129
    %v148 = vpop.f32.mrf.mxu0
    %v149 = vadd.f32 %v125, %v148
    %150 = vdwg.mxu0
    %v151 = vld [vmem:[%s6] sm:$0xff]
    %v153 = vsel %vm127, 0.0, 0
    %155 = vmatpush.msra.mxu0 0.0
    %156 = vmatpush.msra.mxu0 0.0
    %157 = vmatpush.msra.mxu0 0.0
    %158 = vmatpush.msra.mxu0 0.0
    %159 = vmatpush.msra.mxu0 0.0
    %160 = vmatpush.msra.mxu0 0.0
    %161 = vmatpush.msra.mxu0 0.0
    %162 = vmatpush.msra.mxu0 0.0
    %163 = vmatpush.msra.mxu0 0.0
    %164 = vmatpush.msra.mxu0 0.0
    %165 = vmatpush.msra.mxu0 0.0
    %166 = vmatpush.msra.mxu0 0.0
    %167 = vmatpush.msra.mxu0 0.0
    %168 = vmatpush.msra.mxu0 0.0
    %169 = vmatpush.msra.mxu0 0.0
    %170 = vmatpush.msra.mxu0 %v151
    %171 = vmatmul.f32.gmra.mxu0 %v153
    %v172 = vpop.f32.mrf.mxu0
    %v173 = vadd.f32 0.0, %v172
    %174 = vdwg.mxu0
    %v175 = vadd.f32 %v149, %v173
    %v176 = vsub.f32 0.0, %v175
    %v177 = vmul.f32 %v176, 1.442695
    %v178 = vpow.pop %v177
    %v179 = vadd.f32 %v178, 1.0
    %v180 = vrcp.pop %v179
    %v181 = vmul.f32 %v179, %v180
    %v182 = vsub.f32 1.0, %v181
    %v183 = vmul.f32 %v180, %v182
    %v184 = vadd.f32 %v180, %v183
    %vm185 = vweird.f32 %v179
    %vm186 = vweird.f32 %v180
    %vm187 = vmor %vm185, %vm186
    %v188 = vsel %vm187, %v180, %v184
    %v189 = vand.u32 2147483647, %v179
    %vm190 = vcmp.eq.f32.partialorder %v189, 8.507059e+37
    %v191 = vand.u32 %v179, 2147483648
    %v192 = vor.u32 1.1754944e-38, %v191
    %v193 = vsel %vm190, %v192, %v188
    %v194 = vmul.f32 1.0, %v193
    %v195 = vtanh.pop %v175
    %v196 = vmul.f32 %v194, 0.0
    %198 = vrot.lane.b32.xlu0 %v195, 112
    %v199 = vpop.permute.xlu0 %198
    %v201 = vmul.f32 %v194, %v199
    %203 = vrot.lane.b32.xlu0 %v201, 8
    %v204 = vpop.permute.xlu0 %203
    %v206 = vadd.f32 %v196, %v204
    %v207 = vtanh.pop %v206
    %209 = vrot.lane.b32.xlu0 %v207, 16
    %v210 = vpop.permute.xlu0 %209
    %v212 = vmul.f32 %v194, %v210
    %214 = vrot.lane.b32.xlu0 %v212, 104
    %v215 = vpop.permute.xlu0 %214
    %v216 = vsel %vm127, %v215, 0
    %218 = vmatpush.msra.mxu0 0.0
    %219 = vmatpush.msra.mxu0 0.0
    %220 = vmatpush.msra.mxu0 0.0
    %221 = vmatpush.msra.mxu0 0.0
    %222 = vmatpush.msra.mxu0 0.0
    %223 = vmatpush.msra.mxu0 0.0
    %224 = vmatpush.msra.mxu0 0.0
    %225 = vmatpush.msra.mxu0 0.0
    %226 = vmatpush.msra.mxu0 0.0
    %227 = vmatpush.msra.mxu0 0.0
    %228 = vmatpush.msra.mxu0 0.0
    %229 = vmatpush.msra.mxu0 0.0
    %230 = vmatpush.msra.mxu0 0.0
    %231 = vmatpush.msra.mxu0 0.0
    %232 = vmatpush.msra.mxu0 0.0
    %233 = vmatpush.msra.mxu0 %v151
    %234 = vmatmul.f32.gmra.mxu0 %v216
    %v235 = vpop.f32.mrf.mxu0
    %v236 = vadd.f32 0.0, %v235
    %237 = vdwg.mxu0
    %v239 = vrot.slane %v236, 7
    %v241 = vadd.f32 %v149, %v239
    %v242 = vsub.f32 0.0, %v241
    %v243 = vmul.f32 %v242, 1.442695
    %v244 = vpow.pop %v243
    %v245 = vadd.f32 %v244, 1.0
    %v246 = vrcp.pop %v245
    %v247 = vmul.f32 %v245, %v246
    %v248 = vsub.f32 1.0, %v247
    %v249 = vmul.f32 %v246, %v248
    %v250 = vadd.f32 %v246, %v249
    %vm251 = vweird.f32 %v245
    %vm252 = vweird.f32 %v246
    %vm253 = vmor %vm251, %vm252
    %v254 = vsel %vm253, %v246, %v250
    %v255 = vand.u32 2147483647, %v245
    %vm256 = vcmp.eq.f32.partialorder %v255, 8.507059e+37
    %v257 = vand.u32 %v245, 2147483648
    %v258 = vor.u32 1.1754944e-38, %v257
    %v259 = vsel %vm256, %v258, %v254
    %v260 = vmul.f32 1.0, %v259
    %v261 = vtanh.pop %v241
    %v263 = vrot.slane %v206, 7
    %v265 = vmul.f32 %v260, %v263
    %267 = vrot.lane.b32.xlu0 %v261, 112
    %v268 = vpop.permute.xlu0 %267
    %v270 = vmul.f32 %v260, %v268
    %272 = vrot.lane.b32.xlu0 %v270, 8
    %v273 = vpop.permute.xlu0 %272
    %v275 = vadd.f32 %v265, %v273
    %v276 = vtanh.pop %v275
    %278 = vrot.lane.b32.xlu0 %v276, 16
    %v279 = vpop.permute.xlu0 %278
    %v281 = vmul.f32 %v260, %v279
    %v283 = vrot.slane %v281, 1
    %284 = vrot.lane.b32.xlu0 %v283, 104
    %v285 = vpop.permute.xlu0 %284
    %v286 = vsel %vm127, %v285, 0
    %288 = vmatpush.msra.mxu0 0.0
    %289 = vmatpush.msra.mxu0 0.0
    %290 = vmatpush.msra.mxu0 0.0
    %291 = vmatpush.msra.mxu0 0.0
    %292 = vmatpush.msra.mxu0 0.0
    %293 = vmatpush.msra.mxu0 0.0
    %294 = vmatpush.msra.mxu0 0.0
    %295 = vmatpush.msra.mxu0 0.0
    %296 = vmatpush.msra.mxu0 0.0
    %297 = vmatpush.msra.mxu0 0.0
    %298 = vmatpush.msra.mxu0 0.0
    %299 = vmatpush.msra.mxu0 0.0
    %300 = vmatpush.msra.mxu0 0.0
    %301 = vmatpush.msra.mxu0 0.0
    %302 = vmatpush.msra.mxu0 0.0
    %303 = vmatpush.msra.mxu0 %v151
    %304 = vmatmul.f32.gmra.mxu0 %v286
    %v305 = vpop.f32.mrf.mxu0
    %v306 = vadd.f32 0.0, %v305
    %307 = vdwg.mxu0
    %v309 = vrot.slane %v306, 6
    %v311 = vadd.f32 %v149, %v309
    %v312 = vsub.f32 0.0, %v311
    %v313 = vmul.f32 %v312, 1.442695
    %v314 = vpow.pop %v313
    %v315 = vadd.f32 %v314, 1.0
    %v316 = vrcp.pop %v315
    %v317 = vmul.f32 %v315, %v316
    %v318 = vsub.f32 1.0, %v317
    %v319 = vmul.f32 %v316, %v318
    %v320 = vadd.f32 %v316, %v319
    %vm321 = vweird.f32 %v315
    %vm322 = vweird.f32 %v316
    %vm323 = vmor %vm321, %vm322
    %v324 = vsel %vm323, %v316, %v320
    %v325 = vand.u32 2147483647, %v315
    %vm326 = vcmp.eq.f32.partialorder %v325, 8.507059e+37
    %v327 = vand.u32 %v315, 2147483648
    %v328 = vor.u32 1.1754944e-38, %v327
    %v329 = vsel %vm326, %v328, %v324
    %v330 = vmul.f32 1.0, %v329
    %v331 = vtanh.pop %v311
    %v333 = vrot.slane %v275, 7
    %v335 = vmul.f32 %v330, %v333
    %337 = vrot.lane.b32.xlu0 %v331, 112
    %v338 = vpop.permute.xlu0 %337
    %v340 = vmul.f32 %v330, %v338
    %342 = vrot.lane.b32.xlu0 %v340, 8
    %v343 = vpop.permute.xlu0 %342
    %v345 = vadd.f32 %v335, %v343
    %v346 = vtanh.pop %v345
    %348 = vrot.lane.b32.xlu0 %v346, 16
    %v349 = vpop.permute.xlu0 %348
    %v351 = vmul.f32 %v330, %v349
    %v353 = vrot.slane %v351, 2
    %354 = vrot.lane.b32.xlu0 %v353, 104
    %v355 = vpop.permute.xlu0 %354
    %v356 = vsel %vm127, %v355, 0
    %358 = vmatpush.msra.mxu0 0.0
    %359 = vmatpush.msra.mxu0 0.0
    %360 = vmatpush.msra.mxu0 0.0
    %361 = vmatpush.msra.mxu0 0.0
    %362 = vmatpush.msra.mxu0 0.0
    %363 = vmatpush.msra.mxu0 0.0
    %364 = vmatpush.msra.mxu0 0.0
    %365 = vmatpush.msra.mxu0 0.0
    %366 = vmatpush.msra.mxu0 0.0
    %367 = vmatpush.msra.mxu0 0.0
    %368 = vmatpush.msra.mxu0 0.0
    %369 = vmatpush.msra.mxu0 0.0
    %370 = vmatpush.msra.mxu0 0.0
    %371 = vmatpush.msra.mxu0 0.0
    %372 = vmatpush.msra.mxu0 0.0
    %373 = vmatpush.msra.mxu0 %v151
    %374 = vmatmul.f32.gmra.mxu0 %v356
    %v375 = vpop.f32.mrf.mxu0
    %v376 = vadd.f32 0.0, %v375
    %377 = vdwg.mxu0
    %v379 = vrot.slane %v376, 5
    %v381 = vadd.f32 %v149, %v379
    %v382 = vsub.f32 0.0, %v381
    %v383 = vmul.f32 %v382, 1.442695
    %v384 = vpow.pop %v383
    %v385 = vadd.f32 %v384, 1.0
    %v386 = vrcp.pop %v385
    %v387 = vmul.f32 %v385, %v386
    %v388 = vsub.f32 1.0, %v387
    %v389 = vmul.f32 %v386, %v388
    %v390 = vadd.f32 %v386, %v389
    %vm391 = vweird.f32 %v385
    %vm392 = vweird.f32 %v386
    %vm393 = vmor %vm391, %vm392
    %v394 = vsel %vm393, %v386, %v390
    %v395 = vand.u32 2147483647, %v385
    %vm396 = vcmp.eq.f32.partialorder %v395, 8.507059e+37
    %v397 = vand.u32 %v385, 2147483648
    %v398 = vor.u32 1.1754944e-38, %v397
    %v399 = vsel %vm396, %v398, %v394
    %v400 = vmul.f32 1.0, %v399
    %v401 = vtanh.pop %v381
    %v403 = vrot.slane %v345, 7
    %v405 = vmul.f32 %v400, %v403
    %407 = vrot.lane.b32.xlu0 %v401, 112
    %v408 = vpop.permute.xlu0 %407
    %v410 = vmul.f32 %v400, %v408
    %412 = vrot.lane.b32.xlu0 %v410, 8
    %v413 = vpop.permute.xlu0 %412
    %v415 = vadd.f32 %v405, %v413
    %v416 = vtanh.pop %v415
    %418 = vrot.lane.b32.xlu0 %v416, 16
    %v419 = vpop.permute.xlu0 %418
    %v421 = vmul.f32 %v400, %v419
    %v423 = vrot.slane %v421, 3
    %424 = vrot.lane.b32.xlu0 %v423, 104
    %v425 = vpop.permute.xlu0 %424
    %v426 = vsel %vm127, %v425, 0
    %428 = vmatpush.msra.mxu0 0.0
    %429 = vmatpush.msra.mxu0 0.0
    %430 = vmatpush.msra.mxu0 0.0
    %431 = vmatpush.msra.mxu0 0.0
    %432 = vmatpush.msra.mxu0 0.0
    %433 = vmatpush.msra.mxu0 0.0
    %434 = vmatpush.msra.mxu0 0.0
    %435 = vmatpush.msra.mxu0 0.0
    %436 = vmatpush.msra.mxu0 0.0
    %437 = vmatpush.msra.mxu0 0.0
    %438 = vmatpush.msra.mxu0 0.0
    %439 = vmatpush.msra.mxu0 0.0
    %440 = vmatpush.msra.mxu0 0.0
    %441 = vmatpush.msra.mxu0 0.0
    %442 = vmatpush.msra.mxu0 0.0
    %443 = vmatpush.msra.mxu0 %v151
    %444 = vmatmul.f32.gmra.mxu0 %v426
    %v445 = vpop.f32.mrf.mxu0
    %v446 = vadd.f32 0.0, %v445
    %447 = vdwg.mxu0
    %v449 = vrot.slane %v446, 4
    %v451 = vadd.f32 %v149, %v449
    %v452 = vsub.f32 0.0, %v451
    %v453 = vmul.f32 %v452, 1.442695
    %v454 = vpow.pop %v453
    %v455 = vadd.f32 %v454, 1.0
    %v456 = vrcp.pop %v455
    %v457 = vmul.f32 %v455, %v456
    %v458 = vsub.f32 1.0, %v457
    %v459 = vmul.f32 %v456, %v458
    %v460 = vadd.f32 %v456, %v459
    %vm461 = vweird.f32 %v455
    %vm462 = vweird.f32 %v456
    %vm463 = vmor %vm461, %vm462
    %v464 = vsel %vm463, %v456, %v460
    %v465 = vand.u32 2147483647, %v455
    %vm466 = vcmp.eq.f32.partialorder %v465, 8.507059e+37
    %v467 = vand.u32 %v455, 2147483648
    %v468 = vor.u32 1.1754944e-38, %v467
    %v469 = vsel %vm466, %v468, %v464
    %v470 = vmul.f32 1.0, %v469
    %v471 = vtanh.pop %v451
    %v473 = vrot.slane %v415, 7
    %v475 = vmul.f32 %v470, %v473
    %477 = vrot.lane.b32.xlu0 %v471, 112
    %v478 = vpop.permute.xlu0 %477
    %v480 = vmul.f32 %v470, %v478
    %482 = vrot.lane.b32.xlu0 %v480, 8
    %v483 = vpop.permute.xlu0 %482
    %v485 = vadd.f32 %v475, %v483
    %v486 = vtanh.pop %v485
    %488 = vrot.lane.b32.xlu0 %v486, 16
    %v489 = vpop.permute.xlu0 %488
    %v491 = vmul.f32 %v470, %v489
    %v493 = vrot.slane %v491, 4
    %494 = vrot.lane.b32.xlu0 %v493, 104
    %v495 = vpop.permute.xlu0 %494
    %v496 = vsel %vm127, %v495, 0
    %498 = vmatpush.msra.mxu0 0.0
    %499 = vmatpush.msra.mxu0 0.0
    %500 = vmatpush.msra.mxu0 0.0
    %501 = vmatpush.msra.mxu0 0.0
    %502 = vmatpush.msra.mxu0 0.0
    %503 = vmatpush.msra.mxu0 0.0
    %504 = vmatpush.msra.mxu0 0.0
    %505 = vmatpush.msra.mxu0 0.0
    %506 = vmatpush.msra.mxu0 0.0
    %507 = vmatpush.msra.mxu0 0.0
    %508 = vmatpush.msra.mxu0 0.0
    %509 = vmatpush.msra.mxu0 0.0
    %510 = vmatpush.msra.mxu0 0.0
    %511 = vmatpush.msra.mxu0 0.0
    %512 = vmatpush.msra.mxu0 0.0
    %513 = vmatpush.msra.mxu0 %v151
    %514 = vmatmul.f32.gmra.mxu0 %v496
    %v515 = vpop.f32.mrf.mxu0
    %v516 = vadd.f32 0.0, %v515
    %517 = vdwg.mxu0
    %v519 = vrot.slane %v516, 3
    %v521 = vadd.f32 %v149, %v519
    %v522 = vsub.f32 0.0, %v521
    %v523 = vmul.f32 %v522, 1.442695
    %v524 = vpow.pop %v523
    %v525 = vadd.f32 %v524, 1.0
    %v526 = vrcp.pop %v525
    %v527 = vmul.f32 %v525, %v526
    %v528 = vsub.f32 1.0, %v527
    %v529 = vmul.f32 %v526, %v528
    %v530 = vadd.f32 %v526, %v529
    %vm531 = vweird.f32 %v525
    %vm532 = vweird.f32 %v526
    %vm533 = vmor %vm531, %vm532
    %v534 = vsel %vm533, %v526, %v530
    %v535 = vand.u32 2147483647, %v525
    %vm536 = vcmp.eq.f32.partialorder %v535, 8.507059e+37
    %v537 = vand.u32 %v525, 2147483648
    %v538 = vor.u32 1.1754944e-38, %v537
    %v539 = vsel %vm536, %v538, %v534
    %v540 = vmul.f32 1.0, %v539
    %v541 = vtanh.pop %v521
    %v543 = vrot.slane %v485, 7
    %v545 = vmul.f32 %v540, %v543
    %547 = vrot.lane.b32.xlu0 %v541, 112
    %v548 = vpop.permute.xlu0 %547
    %v550 = vmul.f32 %v540, %v548
    %552 = vrot.lane.b32.xlu0 %v550, 8
    %v553 = vpop.permute.xlu0 %552
    %v555 = vadd.f32 %v545, %v553
    %v556 = vtanh.pop %v555
    %558 = vrot.lane.b32.xlu0 %v556, 16
    %v559 = vpop.permute.xlu0 %558
    %v561 = vmul.f32 %v540, %v559
    %v563 = vrot.slane %v561, 5
    %564 = vrot.lane.b32.xlu0 %v563, 104
    %v565 = vpop.permute.xlu0 %564
    %v566 = vsel %vm127, %v565, 0
    %568 = vmatpush.msra.mxu0 0.0
    %569 = vmatpush.msra.mxu0 0.0
    %570 = vmatpush.msra.mxu0 0.0
    %571 = vmatpush.msra.mxu0 0.0
    %572 = vmatpush.msra.mxu0 0.0
    %573 = vmatpush.msra.mxu0 0.0
    %574 = vmatpush.msra.mxu0 0.0
    %575 = vmatpush.msra.mxu0 0.0
    %576 = vmatpush.msra.mxu0 0.0
    %577 = vmatpush.msra.mxu0 0.0
    %578 = vmatpush.msra.mxu0 0.0
    %579 = vmatpush.msra.mxu0 0.0
    %580 = vmatpush.msra.mxu0 0.0
    %581 = vmatpush.msra.mxu0 0.0
    %582 = vmatpush.msra.mxu0 0.0
    %583 = vmatpush.msra.mxu0 %v151
    %584 = vmatmul.f32.gmra.mxu0 %v566
    %v585 = vpop.f32.mrf.mxu0
    %v586 = vadd.f32 0.0, %v585
    %587 = vdwg.mxu0
    %v589 = vrot.slane %v586, 2
    %v591 = vadd.f32 %v149, %v589
    %v592 = vsub.f32 0.0, %v591
    %v593 = vmul.f32 %v592, 1.442695
    %v594 = vpow.pop %v593
    %v595 = vadd.f32 %v594, 1.0
    %v596 = vrcp.pop %v595
    %v597 = vmul.f32 %v595, %v596
    %v598 = vsub.f32 1.0, %v597
    %v599 = vmul.f32 %v596, %v598
    %v600 = vadd.f32 %v596, %v599
    %vm601 = vweird.f32 %v595
    %vm602 = vweird.f32 %v596
    %vm603 = vmor %vm601, %vm602
    %v604 = vsel %vm603, %v596, %v600
    %v605 = vand.u32 2147483647, %v595
    %vm606 = vcmp.eq.f32.partialorder %v605, 8.507059e+37
    %v607 = vand.u32 %v595, 2147483648
    %v608 = vor.u32 1.1754944e-38, %v607
    %v609 = vsel %vm606, %v608, %v604
    %v610 = vmul.f32 1.0, %v609
    %v611 = vtanh.pop %v591
    %v613 = vrot.slane %v555, 7
    %v615 = vmul.f32 %v610, %v613
    %617 = vrot.lane.b32.xlu0 %v611, 112
    %v618 = vpop.permute.xlu0 %617
    %v620 = vmul.f32 %v610, %v618
    %622 = vrot.lane.b32.xlu0 %v620, 8
    %v623 = vpop.permute.xlu0 %622
    %v625 = vadd.f32 %v615, %v623
    %v626 = vtanh.pop %v625
    %628 = vrot.lane.b32.xlu0 %v626, 16
    %v629 = vpop.permute.xlu0 %628
    %v631 = vmul.f32 %v610, %v629
    %v633 = vrot.slane %v631, 6
    %634 = vrot.lane.b32.xlu0 %v633, 104
    %v635 = vpop.permute.xlu0 %634
    %v636 = vsel %vm127, %v635, 0
    %638 = vmatpush.msra.mxu0 0.0
    %639 = vmatpush.msra.mxu0 0.0
    %640 = vmatpush.msra.mxu0 0.0
    %641 = vmatpush.msra.mxu0 0.0
    %642 = vmatpush.msra.mxu0 0.0
    %643 = vmatpush.msra.mxu0 0.0
    %644 = vmatpush.msra.mxu0 0.0
    %645 = vmatpush.msra.mxu0 0.0
    %646 = vmatpush.msra.mxu0 0.0
    %647 = vmatpush.msra.mxu0 0.0
    %648 = vmatpush.msra.mxu0 0.0
    %649 = vmatpush.msra.mxu0 0.0
    %650 = vmatpush.msra.mxu0 0.0
    %651 = vmatpush.msra.mxu0 0.0
    %652 = vmatpush.msra.mxu0 0.0
    %653 = vmatpush.msra.mxu0 %v151
    %654 = vmatmul.f32.gmra.mxu0 %v636
    %v655 = vpop.f32.mrf.mxu0
    %v656 = vadd.f32 0.0, %v655
    %657 = vdwg.mxu0
    %v659 = vrot.slane %v656, 1
    %v661 = vadd.f32 %v149, %v659
    %v662 = vsub.f32 0.0, %v661
    %v663 = vmul.f32 %v662, 1.442695
    %v664 = vpow.pop %v663
    %v665 = vadd.f32 %v664, 1.0
    %v666 = vrcp.pop %v665
    %v667 = vmul.f32 %v665, %v666
    %v668 = vsub.f32 1.0, %v667
    %v669 = vmul.f32 %v666, %v668
    %v670 = vadd.f32 %v666, %v669
    %vm671 = vweird.f32 %v665
    %vm672 = vweird.f32 %v666
    %vm673 = vmor %vm671, %vm672
    %v674 = vsel %vm673, %v666, %v670
    %v675 = vand.u32 2147483647, %v665
    %vm676 = vcmp.eq.f32.partialorder %v675, 8.507059e+37
    %v677 = vand.u32 %v665, 2147483648
    %v678 = vor.u32 1.1754944e-38, %v677
    %v679 = vsel %vm676, %v678, %v674
    %v680 = vmul.f32 1.0, %v679
    %v681 = vtanh.pop %v661
    %v683 = vrot.slane %v625, 7
    %v685 = vmul.f32 %v680, %v683
    %687 = vrot.lane.b32.xlu0 %v681, 112
    %v688 = vpop.permute.xlu0 %687
    %v690 = vmul.f32 %v680, %v688
    %692 = vrot.lane.b32.xlu0 %v690, 8
    %v693 = vpop.permute.xlu0 %692
    %v695 = vadd.f32 %v685, %v693
    %v696 = vtanh.pop %v695
    %698 = vrot.lane.b32.xlu0 %v696, 16
    %v699 = vpop.permute.xlu0 %698
    %v701 = vmul.f32 %v680, %v699
    %v702 = vld [vmem:[%s8] sm:$0xff]
    %v703 = vld [vmem:[%s9] sm:$0x1]
    %v705 = vrot.slane %v701, 7
    %706 = vrot.lane.b32.xlu0 %v705, 104
    %v707 = vpop.permute.xlu0 %706
    %v708 = vsel %vm127, %v707, 0
    %710 = vmatpush.msra.mxu0 0.0
    %711 = vmatpush.msra.mxu0 0.0
    %712 = vmatpush.msra.mxu0 0.0
    %713 = vmatpush.msra.mxu0 0.0
    %714 = vmatpush.msra.mxu0 0.0
    %715 = vmatpush.msra.mxu0 0.0
    %716 = vmatpush.msra.mxu0 0.0
    %717 = vmatpush.msra.mxu0 0.0
    %718 = vmatpush.msra.mxu0 0.0
    %719 = vmatpush.msra.mxu0 0.0
    %720 = vmatpush.msra.mxu0 0.0
    %721 = vmatpush.msra.mxu0 0.0
    %722 = vmatpush.msra.mxu0 0.0
    %723 = vmatpush.msra.mxu0 0.0
    %724 = vmatpush.msra.mxu0 0.0
    %725 = vmatpush.msra.mxu0 %v702
    %726 = vmatmul.f32.gmra.mxu0 %v708
    %v727 = vpop.f32.mrf.mxu0
    %v728 = vadd.f32 %v703, %v727
    %729 = vdwg.mxu0
    %v730 = vmax.f32 %v728, 0.0
    %v731 = vld [vmem:[%s10] sm:$0xff]
    %v732 = vld [vmem:[%s10 + $0x8] sm:$0xff]
    %v733 = vld [vmem:[%s10 + $0x10] sm:$0xff]
    %v734 = vld [vmem:[%s10 + $0x18] sm:$0xff]
    %v735 = vld [vmem:[%s11] sm:$0x1]
    %v737 = vsel %vm98, %v730, 0
    %739 = vmatpush.msra.mxu0 0.0
    %740 = vmatpush.msra.mxu0 0.0
    %741 = vmatpush.msra.mxu0 0.0
    %742 = vmatpush.msra.mxu0 0.0
    %743 = vmatpush.msra.mxu0 0.0
    %744 = vmatpush.msra.mxu0 0.0
    %745 = vmatpush.msra.mxu0 0.0
    %746 = vmatpush.msra.mxu0 0.0
    %747 = vmatpush.msra.mxu0 0.0
    %748 = vmatpush.msra.mxu0 0.0
    %749 = vmatpush.msra.mxu0 0.0
    %750 = vmatpush.msra.mxu0 0.0
    %751 = vmatpush.msra.mxu0 %v734
    %752 = vmatpush.msra.mxu0 %v733
    %753 = vmatpush.msra.mxu0 %v732
    %754 = vmatpush.msra.mxu0 %v731
    %755 = vmatmul.f32.gmra.mxu0 %v737
    %v756 = vpop.f32.mrf.mxu0
    %v757 = vadd.f32 %v735, %v756
    %758 = vdwg.mxu0
    %759 = vst [vmem:[#allocation2] sm:$0x1] %v757
    // Predicated region
    $region50: #{tpu_custom_call.1} parent=1 // pred_check
      _
    $region51: #{tpu_custom_call.1} parent=1 // pred_check_branch
      %761 = sbr.rel (0) target = $region53
    $region52: #{tpu_custom_call.1} parent=1 // pred_region
      %763 = vsyncadd [#allocation3], 0
      %s765 = sshll.u32 [#allocation2], 4
      %s766 = int_to_ptr.vmem [resolvable:$true] %s765
      %s767 = sshll.u32 %s12, 4
      %s768 = int_to_ptr.hbm [resolvable:$true] %s767
      %770 = dma.vmem_to_hbm [thread:$0]  %s766, 16, %s768, [#allocation3]
    $region53: #{tpu_custom_call.1} parent=1 // pred_fallthru
      _
    // Predicated region
    $region54: #{tpu_custom_call.1} parent=1 // pred_check
      _
    $region55: #{tpu_custom_call.1} parent=1 // pred_check_branch
      %772 = sbr.rel (0) target = $region57
    $region56: #{tpu_custom_call.1} parent=1 // pred_region
      %774 = dma.done [#allocation3], 16
    $region57: #{tpu_custom_call.1} parent=1 // pred_fallthru
      _
    %775 = vsyncpa [#allocation3], 1

</llo_original>
